<compile_context>
chip_gen: v7x
topology: tpu7x:2x2x1
jax: 0.10.0
libtpu: 0.0.40
codegen_flags: <defaults>
</compile_context>

<pallas_src>
import functools

import jax
import jax.numpy as jnp
from jax.experimental import pallas as pl
from jax.experimental.pallas import tpu as pltpu


def _joints_mse_kernel(pred_ref, gt_ref, w_ref, out_ref, acc_ref, *,
                       scale, tile_rows, hw, acc_rows):
    i = pl.program_id(0)

    @pl.when(i == 0)
    def _():
        acc_ref[...] = jnp.zeros_like(acc_ref)

    # In-kernel cast: inputs stream in their native dtype (bf16 halves HBM reads).
    p = pred_ref[...].astype(jnp.float32)          # (tile_rows, hw)
    g = gt_ref[...].astype(jnp.float32)            # (tile_rows, hw)
    w = w_ref[...].astype(jnp.float32)             # (tile_rows, 1), lane-broadcast
    d = (p - g) * w
    dd = d * d

    if acc_rows == 8:
        # tile_rows is a multiple of 8: fold row groups with (8,128)-aligned
        # static slices — pure VPU adds, no cross-lane/sublane movement.
        part = dd[0:8, :]
        for r in range(1, tile_rows // 8):
            part = part + dd[r * 8:(r + 1) * 8, :]
    else:
        # Rare fallback: a single small block whose row count is not 8-aligned.
        part = jnp.sum(dd, axis=0, keepdims=True)
    acc_ref[...] += part

    @pl.when(i == pl.num_programs(0) - 1)
    def _():
        # Single cross-lane/sublane reduction at the very end.
        out_ref[0, 0] = jnp.sum(acc_ref[...]) * jnp.float32(scale)


def _choose_tile_rows(rows, bytes_per_row, budget_bytes):
    """Largest 8-aligned row tile that divides `rows` and fits the budget."""
    cap = max(8, (budget_bytes // max(bytes_per_row, 1)) // 8 * 8)
    if rows <= cap:
        return rows                      # single full-extent block
    if rows % 8 == 0:
        t = min(cap, rows)
        t -= t % 8
        while t >= 8:
            if rows % t == 0:
                return t
            t -= 8
    return rows                          # fallback: single full block


def joints_mse_loss(output, target, target_weight, use_target_weight=True,
                    block_budget_bytes=8 * 1024 * 1024):
    """output/target: (B, J, H, W); target_weight: (B, J, 1). Returns scalar f32."""
    B, J, H, W = output.shape
    HW = H * W
    rows = B * J

    # Free, contiguous reshapes — no transposes, no extra HBM traffic.
    pred = output.reshape(rows, HW)
    gt = target.reshape(rows, HW)
    if use_target_weight:
        w = target_weight.reshape(rows, 1).astype(jnp.float32)
    else:
        w = jnp.ones((rows, 1), dtype=jnp.float32)

    bytes_per_row = HW * (pred.dtype.itemsize + gt.dtype.itemsize) + 4
    tile_rows = _choose_tile_rows(rows, bytes_per_row, block_budget_bytes)
    grid = (rows // tile_rows,)                  # exact by construction
    acc_rows = 8 if tile_rows % 8 == 0 else 1

    scale = 0.5 / float(J * B * HW)

    # VMEM: double-buffered input blocks + accumulator (+ slack). Keep well
    # under the 64 MiB physical VMEM of v7x.
    blk_bytes = tile_rows * (HW * (pred.dtype.itemsize + gt.dtype.itemsize) + 128 * 4)
    needed = 2 * blk_bytes + acc_rows * HW * 4 + (1 << 20)
    vmem_limit = int(min(max(32 * 1024 * 1024, needed), 128 * 1024 * 1024))

    kernel = functools.partial(_joints_mse_kernel, scale=scale,
                               tile_rows=tile_rows, hw=HW, acc_rows=acc_rows)

    out = pl.pallas_call(
        kernel,
        out_shape=jax.ShapeDtypeStruct((1, 1), jnp.float32),
        grid_spec=pltpu.PrefetchScalarGridSpec(
            num_scalar_prefetch=0,
            grid=grid,
            in_specs=[
                pl.BlockSpec((tile_rows, HW), lambda i: (i, 0)),
                pl.BlockSpec((tile_rows, HW), lambda i: (i, 0)),
                pl.BlockSpec((tile_rows, 1), lambda i: (i, 0)),
            ],
            out_specs=pl.BlockSpec(memory_space=pltpu.SMEM),
            scratch_shapes=[pltpu.VMEM((acc_rows, HW), jnp.float32)],
        ),
        compiler_params=pltpu.CompilerParams(
            dimension_semantics=("arbitrary",),
            vmem_limit_bytes=vmem_limit,
        ),
    )(pred, gt, w)
    return out[0, 0]


def _reference_loss(output, target, target_weight, use_target_weight=True):
    B, J, H, W = output.shape
    pred = output.reshape(B, J, H * W).astype(jnp.float32)
    gt = target.reshape(B, J, H * W).astype(jnp.float32)
    loss = 0.0
    for idx in range(J):
        hp = pred[:, idx, :]
        hg = gt[:, idx, :]
        if use_target_weight:
            wj = target_weight[:, idx].astype(jnp.float32)  # (B, 1)
            hp = hp * wj
            hg = hg * wj
        loss += 0.5 * jnp.mean((hp - hg) ** 2)
    return loss / J


if __name__ == "__main__":
    key = jax.random.PRNGKey(0)
    k1, k2, k3, k4, k5, k6 = jax.random.split(key, 6)

    # Small case (single block, grid = 1).
    B, J, H, W = 2, 4, 16, 16
    output = jax.random.normal(k1, (B, J, H, W), dtype=jnp.float32)
    target = jax.random.normal(k2, (B, J, H, W), dtype=jnp.float32)
    target_weight = jax.random.uniform(k3, (B, J, 1), dtype=jnp.float32)

    loss = joints_mse_loss(output, target, target_weight, use_target_weight=True)
    jax.block_until_ready(loss)
    ref = _reference_loss(output, target, target_weight, use_target_weight=True)
    assert jnp.allclose(loss, ref, rtol=1e-5, atol=1e-6), (loss, ref)

    # use_target_weight=False branch.
    loss_nw = joints_mse_loss(output, target, target_weight, use_target_weight=False)
    ref_nw = _reference_loss(output, target, target_weight, use_target_weight=False)
    jax.block_until_ready(loss_nw)
    assert jnp.allclose(loss_nw, ref_nw, rtol=1e-5, atol=1e-6), (loss_nw, ref_nw)

    # Multi-step accumulation path: more rows + tiny block budget => grid > 1.
    B2, J2 = 4, 16
    out2 = jax.random.normal(k4, (B2, J2, H, W), dtype=jnp.float32)
    tgt2 = jax.random.normal(k5, (B2, J2, H, W), dtype=jnp.float32)
    tw2 = jax.random.uniform(k6, (B2, J2, 1), dtype=jnp.float32)
    loss2 = joints_mse_loss(out2, tgt2, tw2, use_target_weight=True,
                            block_budget_bytes=1 << 14)
    jax.block_until_ready(loss2)
    ref2 = _reference_loss(out2, tgt2, tw2, use_target_weight=True)
    assert jnp.allclose(loss2, ref2, rtol=1e-5, atol=1e-6), (loss2, ref2)

    print("KERNEL_OK")
</pallas_src>

<mosaic_0001>
module attributes {stable_mosaic.version = 11 : i64} {
  func.func @_joints_mse_kernel(%arg0: i32, %arg1: memref<8x256xf32, #tpu.memory_space<vmem>>, %arg2: memref<8x256xf32, #tpu.memory_space<vmem>>, %arg3: memref<8x1xf32, #tpu.memory_space<vmem>>, %arg4: memref<1x1xf32, #tpu.memory_space<smem>>, %arg5: memref<8x256xf32, #tpu.memory_space<vmem>>) attributes {dimension_semantics = [#tpu.dimension_semantics<arbitrary>], iteration_bounds = array<i64: 1>, scalar_prefetch = 0 : i64, scratch_operands = 1 : i64, tpu.core_type = #tpu.core_type<tc>, window_params = [{transform_indices = @transform_0, window_bounds = array<i64: 8, 256>}, {transform_indices = @transform_1, window_bounds = array<i64: 8, 256>}, {transform_indices = @transform_2, window_bounds = array<i64: 8, 1>}, {transform_indices = @transform_3, window_bounds = array<i64: 1, 1>}]} {
    %c0_i32 = arith.constant 0 : i32
    %0 = arith.cmpi eq, %arg0, %c0_i32 : i32
    %1 = arith.extui %0 : i1 to i32
    %c0_i32_0 = arith.constant 0 : i32
    %2 = arith.cmpi ne, %1, %c0_i32_0 : i32
    scf.if %2 {
      %cst = arith.constant 0.000000e+00 : f32
      %16 = vector.broadcast %cst : f32 to vector<8x256xf32>
      %c0_12 = arith.constant 0 : index
      %c0_13 = arith.constant 0 : index
      %17 = vector.load %arg5[%c0_12, %c0_13] : memref<8x256xf32, #tpu.memory_space<vmem>>, vector<8x256xf32>
      tpu.vector_store %arg5[%c0_12, %c0_13], %16 {strides = array<i32>} : memref<8x256xf32, #tpu.memory_space<vmem>>, vector<8x256xf32>,
    } else {
    }
    %c0 = arith.constant 0 : index
    %c0_1 = arith.constant 0 : index
    %3 = vector.load %arg1[%c0, %c0_1] : memref<8x256xf32, #tpu.memory_space<vmem>>, vector<8x256xf32>
    %c0_2 = arith.constant 0 : index
    %c0_3 = arith.constant 0 : index
    %4 = vector.load %arg2[%c0_2, %c0_3] : memref<8x256xf32, #tpu.memory_space<vmem>>, vector<8x256xf32>
    %c0_4 = arith.constant 0 : index
    %c0_5 = arith.constant 0 : index
    %5 = vector.load %arg3[%c0_4, %c0_5] : memref<8x1xf32, #tpu.memory_space<vmem>>, vector<8x1xf32>
    %6 = arith.subf %3, %4 : vector<8x256xf32>
    %7 = vector.broadcast %5 : vector<8x1xf32> to vector<8x256xf32>
    %8 = arith.mulf %6, %7 : vector<8x256xf32>
    %9 = arith.mulf %8, %8 : vector<8x256xf32>
    %c0_6 = arith.constant 0 : index
    %c0_7 = arith.constant 0 : index
    %10 = vector.load %arg5[%c0_6, %c0_7] : memref<8x256xf32, #tpu.memory_space<vmem>>, vector<8x256xf32>
    %11 = arith.addf %10, %9 : vector<8x256xf32>
    %c0_8 = arith.constant 0 : index
    %c0_9 = arith.constant 0 : index
    %12 = vector.load %arg5[%c0_8, %c0_9] : memref<8x256xf32, #tpu.memory_space<vmem>>, vector<8x256xf32>
    tpu.vector_store %arg5[%c0_8, %c0_9], %11 {strides = array<i32>} : memref<8x256xf32, #tpu.memory_space<vmem>>, vector<8x256xf32>,
    %c0_i32_10 = arith.constant 0 : i32
    %13 = arith.cmpi eq, %arg0, %c0_i32_10 : i32
    %14 = arith.extui %13 : i1 to i32
    %c0_i32_11 = arith.constant 0 : i32
    %15 = arith.cmpi ne, %14, %c0_i32_11 : i32
    scf.if %15 {
      %c0_12 = arith.constant 0 : index
      %c0_13 = arith.constant 0 : index
      %16 = vector.load %arg5[%c0_12, %c0_13] : memref<8x256xf32, #tpu.memory_space<vmem>>, vector<8x256xf32>
      %17 = vector.shape_cast %16 : vector<8x256xf32> to vector<1x8x256xf32>
      %cst = arith.constant dense<0.000000e+00> : vector<1xf32>
      %18 = vector.multi_reduction <add>, %17, %cst [1, 2] : vector<1x8x256xf32> to vector<1xf32>
      %19 = vector.shape_cast %18 : vector<1xf32> to vector<1x1x1xf32>
      %20 = vector.extract %19[0, 0, 0] : f32 from vector<1x1x1xf32>
      %cst_14 = arith.constant 2.44140625E-4 : f32
      %21 = arith.mulf %20, %cst_14 : f32
      %c0_15 = arith.constant 0 : index
      %c0_16 = arith.constant 0 : index
      %22 = memref.load %arg4[%c0_15, %c0_16] : memref<1x1xf32, #tpu.memory_space<smem>>
      memref.store %21, %arg4[%c0_15, %c0_16] : memref<1x1xf32, #tpu.memory_space<smem>>
    } else {
    }
    return
  }
  func.func @transform_0(%arg0: i32) -> (i32, i32) {
    %c0_i32 = arith.constant 0 : i32
    %c0_i32_0 = arith.constant 0 : i32
    return %arg0, %c0_i32 : i32, i32
  }
  func.func @transform_1(%arg0: i32) -> (i32, i32) {
    %c0_i32 = arith.constant 0 : i32
    %c0_i32_0 = arith.constant 0 : i32
    return %arg0, %c0_i32 : i32, i32
  }
  func.func @transform_2(%arg0: i32) -> (i32, i32) {
    %c0_i32 = arith.constant 0 : i32
    %c0_i32_0 = arith.constant 0 : i32
    return %arg0, %c0_i32 : i32, i32
  }
  func.func @transform_3(%arg0: i32) -> (i32, i32) {
    %c0_i32 = arith.constant 0 : i32
    %c0_i32_0 = arith.constant 0 : i32
    %c0_i32_1 = arith.constant 0 : i32
    return %c0_i32, %c0_i32_0 : i32, i32
  }
}

</mosaic_0001>

<llo_original>
// kernel: tpu_custom_call.1
$region0: #{tpu_custom_call.1}
  #allocation0 [shape = 'u32[]', space=smem, size = 0x4, offset = 0x4, fixed_abs, tag = 'smem constant byte address 0x4 - core index']
  #allocation1 [shape = 'u32[144,128]{1,0:T(1,128)}', space=vmem, size = 0x12000, scoped, tag = 'internal scratch']
  #allocation2 [shape = 'f32[8,256]{1,0:T(8,128)}', space=vmem, size = 0x2000, scoped, tag = 'scratch operand']
  %s0 = inlined_call_operand.hbm [shape: f32[8,256], index: 0, kind: input, shape index: {}]
  %s1 = inlined_call_operand.hbm [shape: f32[8,256], index: 1, kind: input, shape index: {}]
  %s2 = inlined_call_operand.vmem [shape: f32[8,1], index: 2, kind: input, shape index: {}]
  %s3 = inlined_call_operand.hbm [shape: f32[1,1], index: 3, kind: output, shape index: {}]
  %s4 = sld [smem:[#allocation0]]
  $region38: #{tpu_custom_call.1} parent=0
    _
  %s6 = ssub.s32 1, %s4
  %s7 = scalar_select 0, %s6, %s4
  $region1: #{tpu_custom_call.1} parent=0
    #allocation3 [shape = 'u8[8192]{0}', space=vmem, size = 0x2000, scoped, tag = 'input window, operand 0, single buffered']
    #allocation4 [shape = 's32[1]{0}', space=sflag, size = 0x4, scoped, tag = 'scoped memory for tpu_custom_call.1']
    #allocation5 [shape = 's32[1]{0}', space=sflag, size = 0x4, scoped, tag = 'scoped memory for tpu_custom_call.1']
    #allocation6 [shape = 'u8[8192]{0}', space=vmem, size = 0x2000, scoped, tag = 'input window, operand 1, single buffered']
    #allocation7 [shape = 's32[1]{0}', space=sflag, size = 0x4, scoped, tag = 'scoped memory for tpu_custom_call.1']
    #allocation8 [shape = 'u8[512]{0}', space=smem, size = 0x200, scoped, tag = 'output window, operand 0, single buffered']
    %8 = vsyncpa [#allocation4], 0
    %9 = vsyncpa [#allocation7], 0
    %10 = vsyncpa [#allocation5], 0
    // Predicated region
    $region2: #{tpu_custom_call.1} parent=1 // pred_check
      _
    $region3: #{tpu_custom_call.1} parent=1 // pred_check_branch
      %12 = sbr.rel (0) target = $region5
    $region4: #{tpu_custom_call.1} parent=1 // pred_region
      %s14 = ssub.s32 256, 256
      %15 = vsyncadd [#allocation4], %s14
      %s17 = sshll.u32 [#allocation3], 4
      %s18 = int_to_ptr.vmem [resolvable:$true] %s17
      %20 = dma.hbm_to_vmem [thread:$0]  %s0, 256, %s18, [#allocation4]
    $region5: #{tpu_custom_call.1} parent=1 // pred_fallthru
      _
    // Predicated region
    $region6: #{tpu_custom_call.1} parent=1 // pred_check
      _
    $region7: #{tpu_custom_call.1} parent=1 // pred_check_branch
      %22 = sbr.rel (0) target = $region9
    $region8: #{tpu_custom_call.1} parent=1 // pred_region
      %s24 = ssub.s32 256, 256
      %25 = vsyncadd [#allocation7], %s24
      %s27 = sshll.u32 [#allocation6], 4
      %s28 = int_to_ptr.vmem [resolvable:$true] %s27
      %30 = dma.hbm_to_vmem [thread:$0]  %s1, 256, %s28, [#allocation7]
    $region9: #{tpu_custom_call.1} parent=1 // pred_fallthru
      _
    // Predicated region
    $region10: #{tpu_custom_call.1} parent=1 // pred_check
      _
    $region11: #{tpu_custom_call.1} parent=1 // pred_check_branch
      %32 = sbr.rel (0) target = $region13
    $region12: #{tpu_custom_call.1} parent=1 // pred_region
      _
    $region13: #{tpu_custom_call.1} parent=1 // pred_fallthru
      _
    // Predicated region
    $region14: #{tpu_custom_call.1} parent=1 // pred_check
      _
    $region15: #{tpu_custom_call.1} parent=1 // pred_check_branch
      %34 = sbr.rel (0) target = $region17
    $region16: #{tpu_custom_call.1} parent=1 // pred_region
      %35 = dma.done [#allocation4], 256
    $region17: #{tpu_custom_call.1} parent=1 // pred_fallthru
      _
    // Predicated region
    $region18: #{tpu_custom_call.1} parent=1 // pred_check
      _
    $region19: #{tpu_custom_call.1} parent=1 // pred_check_branch
      %37 = sbr.rel (0) target = $region21
    $region20: #{tpu_custom_call.1} parent=1 // pred_region
      %38 = dma.done [#allocation7], 256
    $region21: #{tpu_custom_call.1} parent=1 // pred_fallthru
      _
    %p39 = scmp.eq.s32.totalorder 0, 0
    // Predicated region
    $region22: #{tpu_custom_call.1} parent=1 // pred_check
      %p40 = pneg %p39
    $region23: #{tpu_custom_call.1} parent=1 // pred_check_branch
      %42 = sbr.rel (%p40) target = $region25
    $region24: #{tpu_custom_call.1} parent=1 // pred_region
      %43 = vst [vmem:[#allocation2] sm:$0xff] 0.0
      %44 = vst [vmem:[#allocation2 + $0x8] sm:$0xff] 0.0
    $region25: #{tpu_custom_call.1} parent=1 // pred_fallthru
      _
    %v45 = vld [vmem:[#allocation3] sm:$0xff]
    %v46 = vld [vmem:[#allocation3 + $0x8] sm:$0xff]
    %v47 = vld [vmem:[#allocation6] sm:$0xff]
    %v48 = vld [vmem:[#allocation6 + $0x8] sm:$0xff]
    %v49 = vld [vmem:[%s2] sm:$0xff]
    %v50 = vsub.f32 %v45, %v47
    %v51 = vsub.f32 %v46, %v48
    %53 = vset.pattern.permute.xlu0 0
    %54 = vperm.xlu0 %53, %v49
    %v55 = vpop.permute.xlu0 %54
    %v57 = vmul.f32 %v50, %v55
    %v58 = vmul.f32 %v51, %v55
    %v59 = vmul.f32 %v57, %v57
    %v60 = vmul.f32 %v58, %v58
    %v61 = vld [vmem:[#allocation2] sm:$0xff]
    %v62 = vld [vmem:[#allocation2 + $0x8] sm:$0xff]
    %v63 = vadd.f32 %v61, %v59
    %v64 = vadd.f32 %v62, %v60
    %65 = vst [vmem:[#allocation2] sm:$0xff] %v63
    %66 = vst [vmem:[#allocation2 + $0x8] sm:$0xff] %v64
    // Predicated region
    $region26: #{tpu_custom_call.1} parent=1 // pred_check
      %p67 = pneg %p39
    $region27: #{tpu_custom_call.1} parent=1 // pred_check_branch
      %69 = sbr.rel (%p67) target = $region29
    $region28: #{tpu_custom_call.1} parent=1 // pred_region
      %v70 = vld [vmem:[#allocation2] sm:$0xff]
      %v71 = vld [vmem:[#allocation2 + $0x8] sm:$0xff]
      %v72 = vadd.f32 %v70, %v71
      %73 = vadd.xlane.f32.xlu0 %v72
      %v74 = vpop.xlane.xlu0 %73
      %v75 = vrot.slane %v74, 4
      %v76 = vadd.f32 %v74, %v75
      %v77 = vrot.slane %v76, 2
      %v78 = vadd.f32 %v76, %v77
      %v79 = vrot.slane %v78, 1
      %v80 = vadd.f32 %v78, %v79
      %s81 = vtos %v80
      %s82 = smul.f32 %s81, 0.00024414063
      %s83 = scalar_lea.smem [#allocation8], 0
      %84 = sst [smem:[%s83]] %s82
    $region29: #{tpu_custom_call.1} parent=1 // pred_fallthru
      _
    // Predicated region
    $region30: #{tpu_custom_call.1} parent=1 // pred_check
      _
    $region31: #{tpu_custom_call.1} parent=1 // pred_check_branch
      %86 = sbr.rel (0) target = $region33
    $region32: #{tpu_custom_call.1} parent=1 // pred_region
      %s88 = ssub.s32 16, 16
      %89 = vsyncadd [#allocation5], %s88
      %92 = dma.smem_to_hbm [#allocation8], 16, %s3, [#allocation5]
    $region33: #{tpu_custom_call.1} parent=1 // pred_fallthru
      _
    // Predicated region
    $region34: #{tpu_custom_call.1} parent=1 // pred_check
      _
    $region35: #{tpu_custom_call.1} parent=1 // pred_check_branch
      %94 = sbr.rel (0) target = $region37
    $region36: #{tpu_custom_call.1} parent=1 // pred_region
      %95 = dma.done [#allocation5], 16
    $region37: #{tpu_custom_call.1} parent=1 // pred_fallthru
      _
    %96 = sfence
    %97 = vsyncpa [#allocation4], 1
    %98 = vsyncpa [#allocation7], 1
    %99 = vsyncpa [#allocation5], 1

</llo_original>
